<compile_context>
chip_gen: v6e
topology: v6e:2x2x1
jax: 0.10.0
libtpu: 0.0.40
codegen_flags: <defaults>
</compile_context>

<pallas_src>
import functools

import jax
import jax.numpy as jnp
from jax.experimental import pallas as pl
from jax.experimental.pallas import tpu as pltpu

_LANE = 128


def _backproject_kernel(inv_k_ref, depth_ref, out_ref, cam_ref, *, width, sub_tile):
    # inv_k_ref : SMEM (9,)            float32  (scalar-prefetched inv_K[:3,:3], row-major)
    # depth_ref : VMEM (1, S, 128)     float32
    # out_ref   : VMEM (1, 4, S, 128)  float32
    # cam_ref   : VMEM (3, S, 128)     float32  scratch: batch-invariant rays
    j = pl.program_id(0)    # pixel-tile index (outer, "parallel")
    bi = pl.program_id(1)   # batch index      (inner, "arbitrary")

    @pl.when(bi == 0)
    def _compute_rays():
        # Flattened pixel index of every element in this tile.
        row = jax.lax.broadcasted_iota(jnp.int32, (sub_tile, _LANE), 0)
        lane = jax.lax.broadcasted_iota(jnp.int32, (sub_tile, _LANE), 1)
        flat = j * (sub_tile * _LANE) + row * _LANE + lane        # int32, < 2**24

        # x = flat % W, y = flat // W  (meshgrid indexing='xy', row-major flatten).
        # Reciprocal-multiply + truncating cast (flat >= 0) + +/-1 integer fixup:
        # flat_f is exact (< 2**24) and |quotient error| < 1, so the fixup is exact.
        flat_f = flat.astype(jnp.float32)
        q = (flat_f * jnp.float32(1.0 / width)).astype(jnp.int32)
        r = flat - q * width
        q = jnp.where(r < 0, q - 1, q)
        r = jnp.where(r < 0, r + width, r)
        q = jnp.where(r >= width, q + 1, q)
        r = jnp.where(r >= width, r - width, r)
        x = r.astype(jnp.float32)                                  # (S, 128)
        y = q.astype(jnp.float32)                                  # (S, 128)

        k00 = inv_k_ref[0]; k01 = inv_k_ref[1]; k02 = inv_k_ref[2]
        k10 = inv_k_ref[3]; k11 = inv_k_ref[4]; k12 = inv_k_ref[5]
        k20 = inv_k_ref[6]; k21 = inv_k_ref[7]; k22 = inv_k_ref[8]

        cam_ref[0] = k00 * x + k01 * y + k02
        cam_ref[1] = k10 * x + k11 * y + k12
        cam_ref[2] = k20 * x + k21 * y + k22

    # Per-batch hot path: 3 vector muls + 4 dense stores.
    d = depth_ref[0]                                               # (S, 128)
    out_ref[0, 0] = d * cam_ref[0]
    out_ref[0, 1] = d * cam_ref[1]
    out_ref[0, 2] = d * cam_ref[2]
    out_ref[0, 3] = jnp.ones_like(d)


def _pick_sublane_tile(rows, cap):
    # Full second-to-last extent is always a legal block; otherwise use a fixed
    # multiple-of-8 tile and let Pallas mask the ragged last block.
    if rows <= cap:
        return rows
    return cap


@functools.partial(jax.jit, static_argnames=("height", "width", "tile_cap"))
def backproject_depth(depth, inv_K, *, height, width, tile_cap=2048):
    """depth: (B, 1, H, W) or (B, H, W) float32; inv_K: (4,4) or (3,3) float32.

    Returns cam_points of shape (B, 4, H*W), float32 (same as the PyTorch module).
    """
    hw = height * width
    assert hw % _LANE == 0, "H*W must be a multiple of 128"
    assert hw < (1 << 24), "H*W must fit exactly in float32 for in-kernel x/y"
    assert tile_cap % 8 == 0, "tile_cap must be a multiple of 8"

    b = depth.shape[0]
    rows = hw // _LANE
    sub = _pick_sublane_tile(rows, tile_cap)
    n_tiles = pl.cdiv(rows, sub)

    depth_r = depth.reshape(b, rows, _LANE).astype(jnp.float32)    # (B, rows, 128)
    inv_k9 = inv_K[:3, :3].astype(jnp.float32).reshape(9)          # (9,) -> SMEM

    kernel = functools.partial(_backproject_kernel, width=width, sub_tile=sub)

    out = pl.pallas_call(
        kernel,
        out_shape=jax.ShapeDtypeStruct((b, 4, rows, _LANE), jnp.float32),
        grid_spec=pltpu.PrefetchScalarGridSpec(
            num_scalar_prefetch=1,                       # inv_K -> SMEM before grid
            grid=(n_tiles, b),                           # batch innermost (reuse rays)
            in_specs=[
                pl.BlockSpec((1, sub, _LANE), lambda j, bi, invk: (bi, j, 0)),
            ],
            out_specs=pl.BlockSpec((1, 4, sub, _LANE),
                                   lambda j, bi, invk: (bi, 0, j, 0)),
            scratch_shapes=[pltpu.VMEM((3, sub, _LANE), jnp.float32)],
        ),
        compiler_params=pltpu.CompilerParams(
            dimension_semantics=("parallel", "arbitrary"),
            vmem_limit_bytes=32 * 1024 * 1024,
        ),
        cost_estimate=pl.CostEstimate(
            flops=3 * b * hw + 12 * hw,
            transcendentals=0,
            bytes_accessed=(4 + 16) * b * hw + 4 * 9,
        ),
    )(inv_k9, depth_r)

    # Layout-identical free reshape back to the PyTorch output shape.
    return out.reshape(b, 4, hw)


def _reference(depth, inv_K, height, width):
    b = depth.shape[0]
    hw = height * width
    xs, ys = jnp.meshgrid(jnp.arange(width, dtype=jnp.float32),
                          jnp.arange(height, dtype=jnp.float32),
                          indexing="xy")
    pix = jnp.stack([xs.reshape(-1), ys.reshape(-1)], axis=0)          # (2, HW)
    ones = jnp.ones((b, 1, hw), jnp.float32)
    pix_b = jnp.concatenate([jnp.broadcast_to(pix[None], (b, 2, hw)), ones], 1)
    cam = jnp.einsum("ij,bjn->bin", inv_K[:3, :3], pix_b)
    cam = depth.reshape(b, 1, hw) * cam
    return jnp.concatenate([cam, ones], axis=1)


if __name__ == "__main__":
    key = jax.random.PRNGKey(0)
    k_depth, k_invk, k_depth2 = jax.random.split(key, 3)

    # Deterministic synthetic inv_K (4x4), like an inverted intrinsics matrix.
    inv_K = jnp.eye(4, dtype=jnp.float32) + 0.01 * jax.random.normal(
        k_invk, (4, 4), jnp.float32)

    # Case 1: small default config (single tile, batch-reuse path with bi=0/1).
    B, H, W = 2, 16, 16
    depth = jax.random.uniform(k_depth, (B, 1, H, W), jnp.float32,
                               minval=0.1, maxval=5.0)
    out = backproject_depth(depth, inv_K, height=H, width=W)
    out = jax.block_until_ready(out)
    ref = _reference(depth, inv_K, H, W)
    assert out.shape == (B, 4, H * W)
    assert jnp.allclose(out, ref, atol=1e-5, rtol=1e-5)

    # Case 2: small tile cap to exercise multi-tile grid, the masked ragged
    # last block (rows=20, sub=8), and scratch reuse across the batch axis.
    B2, H2, W2 = 3, 16, 160
    depth2 = jax.random.uniform(k_depth2, (B2, 1, H2, W2), jnp.float32,
                                minval=0.1, maxval=5.0)
    out2 = backproject_depth(depth2, inv_K, height=H2, width=W2, tile_cap=8)
    out2 = jax.block_until_ready(out2)
    ref2 = _reference(depth2, inv_K, H2, W2)
    assert out2.shape == (B2, 4, H2 * W2)
    assert jnp.allclose(out2, ref2, atol=1e-5, rtol=1e-5)

    print("KERNEL_OK")
</pallas_src>

<mosaic_0001>
module attributes {stable_mosaic.version = 11 : i64} {
  func.func @_backproject_kernel(%arg0: i32, %arg1: i32, %arg2: memref<9xf32, #tpu.memory_space<smem>>, %arg3: memref<1x2x128xf32, #tpu.memory_space<vmem>>, %arg4: memref<1x4x2x128xf32, #tpu.memory_space<vmem>>, %arg5: memref<3x2x128xf32, #tpu.memory_space<vmem>>) attributes {dimension_semantics = [#tpu.dimension_semantics<parallel>, #tpu.dimension_semantics<arbitrary>], iteration_bounds = array<i64: 1, 2>, scalar_prefetch = 1 : i64, scratch_operands = 1 : i64, tpu.core_type = #tpu.core_type<tc>, window_params = [{transform_indices = @transform_0, window_bounds = array<i64: 1, 2, 128>}, {transform_indices = @transform_1, window_bounds = array<i64: 1, 4, 2, 128>}]} {
    %c0_i32 = arith.constant 0 : i32
    %0 = arith.cmpi eq, %arg1, %c0_i32 : i32
    %1 = arith.extui %0 : i1 to i32
    %c0_i32_0 = arith.constant 0 : i32
    %2 = arith.cmpi ne, %1, %c0_i32_0 : i32
    scf.if %2 {
      %27 = tpu.iota {dimensions = array<i32: 0>} : vector<2x128xi32>
      %28 = tpu.iota {dimensions = array<i32: 1>} : vector<2x128xi32>
      %c256_i32 = arith.constant 256 : i32
      %29 = arith.muli %arg0, %c256_i32 : i32
      %c128_i32 = arith.constant 128 : i32
      %30 = vector.broadcast %c128_i32 : i32 to vector<2x128xi32>
      %31 = arith.muli %27, %30 : vector<2x128xi32>
      %32 = vector.broadcast %29 : i32 to vector<2x128xi32>
      %33 = arith.addi %32, %31 : vector<2x128xi32>
      %34 = arith.addi %33, %28 : vector<2x128xi32>
      %35 = arith.sitofp %34 : vector<2x128xi32> to vector<2x128xf32>
      %cst_25 = arith.constant 6.250000e-02 : f32
      %36 = vector.broadcast %cst_25 : f32 to vector<2x128xf32>
      %37 = arith.mulf %35, %36 : vector<2x128xf32>
      %38 = arith.fptosi %37 : vector<2x128xf32> to vector<2x128xi32>
      %c16_i32 = arith.constant 16 : i32
      %39 = vector.broadcast %c16_i32 : i32 to vector<2x128xi32>
      %40 = arith.muli %38, %39 : vector<2x128xi32>
      %41 = arith.subi %34, %40 : vector<2x128xi32>
      %c0_i32_26 = arith.constant 0 : i32
      %42 = vector.broadcast %c0_i32_26 : i32 to vector<2x128xi32>
      %43 = arith.cmpi slt, %41, %42 : vector<2x128xi32>
      %c1_i32 = arith.constant 1 : i32
      %44 = vector.broadcast %c1_i32 : i32 to vector<2x128xi32>
      %45 = arith.subi %38, %44 : vector<2x128xi32>
      %46 = arith.select %43, %45, %38 : vector<2x128xi1>, vector<2x128xi32>
      %c0_i32_27 = arith.constant 0 : i32
      %47 = vector.broadcast %c0_i32_27 : i32 to vector<2x128xi32>
      %48 = arith.cmpi slt, %41, %47 : vector<2x128xi32>
      %c16_i32_28 = arith.constant 16 : i32
      %49 = vector.broadcast %c16_i32_28 : i32 to vector<2x128xi32>
      %50 = arith.addi %41, %49 : vector<2x128xi32>
      %51 = arith.select %48, %50, %41 : vector<2x128xi1>, vector<2x128xi32>
      %c16_i32_29 = arith.constant 16 : i32
      %52 = vector.broadcast %c16_i32_29 : i32 to vector<2x128xi32>
      %53 = arith.cmpi sge, %51, %52 : vector<2x128xi32>
      %c1_i32_30 = arith.constant 1 : i32
      %54 = vector.broadcast %c1_i32_30 : i32 to vector<2x128xi32>
      %55 = arith.addi %46, %54 : vector<2x128xi32>
      %56 = arith.select %53, %55, %46 : vector<2x128xi1>, vector<2x128xi32>
      %c16_i32_31 = arith.constant 16 : i32
      %57 = vector.broadcast %c16_i32_31 : i32 to vector<2x128xi32>
      %58 = arith.cmpi sge, %51, %57 : vector<2x128xi32>
      %c16_i32_32 = arith.constant 16 : i32
      %59 = vector.broadcast %c16_i32_32 : i32 to vector<2x128xi32>
      %60 = arith.subi %51, %59 : vector<2x128xi32>
      %61 = arith.select %58, %60, %51 : vector<2x128xi1>, vector<2x128xi32>
      %62 = arith.sitofp %61 : vector<2x128xi32> to vector<2x128xf32>
      %63 = arith.sitofp %56 : vector<2x128xi32> to vector<2x128xf32>
      %c0_33 = arith.constant 0 : index
      %64 = memref.load %arg2[%c0_33] : memref<9xf32, #tpu.memory_space<smem>>
      %c1_34 = arith.constant 1 : index
      %65 = memref.load %arg2[%c1_34] : memref<9xf32, #tpu.memory_space<smem>>
      %c2_35 = arith.constant 2 : index
      %66 = memref.load %arg2[%c2_35] : memref<9xf32, #tpu.memory_space<smem>>
      %c3_36 = arith.constant 3 : index
      %67 = memref.load %arg2[%c3_36] : memref<9xf32, #tpu.memory_space<smem>>
      %c4 = arith.constant 4 : index
      %68 = memref.load %arg2[%c4] : memref<9xf32, #tpu.memory_space<smem>>
      %c5 = arith.constant 5 : index
      %69 = memref.load %arg2[%c5] : memref<9xf32, #tpu.memory_space<smem>>
      %c6 = arith.constant 6 : index
      %70 = memref.load %arg2[%c6] : memref<9xf32, #tpu.memory_space<smem>>
      %c7 = arith.constant 7 : index
      %71 = memref.load %arg2[%c7] : memref<9xf32, #tpu.memory_space<smem>>
      %c8 = arith.constant 8 : index
      %72 = memref.load %arg2[%c8] : memref<9xf32, #tpu.memory_space<smem>>
      %73 = vector.broadcast %64 : f32 to vector<2x128xf32>
      %74 = arith.mulf %73, %62 : vector<2x128xf32>
      %75 = vector.broadcast %65 : f32 to vector<2x128xf32>
      %76 = arith.mulf %75, %63 : vector<2x128xf32>
      %77 = arith.addf %74, %76 : vector<2x128xf32>
      %78 = vector.broadcast %66 : f32 to vector<2x128xf32>
      %79 = arith.addf %77, %78 : vector<2x128xf32>
      %c0_37 = arith.constant 0 : index
      %c0_38 = arith.constant 0 : index
      %c0_39 = arith.constant 0 : index
      %80 = vector.load %arg5[%c0_37, %c0_38, %c0_39] : memref<3x2x128xf32, #tpu.memory_space<vmem>>, vector<1x2x128xf32>
      %81 = vector.shape_cast %80 : vector<1x2x128xf32> to vector<2x128xf32>
      %82 = vector.shape_cast %79 : vector<2x128xf32> to vector<1x2x128xf32>
      tpu.vector_store %arg5[%c0_37, %c0_38, %c0_39], %82 {strides = array<i32>} : memref<3x2x128xf32, #tpu.memory_space<vmem>>, vector<1x2x128xf32>,
      %83 = vector.broadcast %67 : f32 to vector<2x128xf32>
      %84 = arith.mulf %83, %62 : vector<2x128xf32>
      %85 = vector.broadcast %68 : f32 to vector<2x128xf32>
      %86 = arith.mulf %85, %63 : vector<2x128xf32>
      %87 = arith.addf %84, %86 : vector<2x128xf32>
      %88 = vector.broadcast %69 : f32 to vector<2x128xf32>
      %89 = arith.addf %87, %88 : vector<2x128xf32>
      %c1_40 = arith.constant 1 : index
      %c0_41 = arith.constant 0 : index
      %c0_42 = arith.constant 0 : index
      %90 = vector.load %arg5[%c1_40, %c0_41, %c0_42] : memref<3x2x128xf32, #tpu.memory_space<vmem>>, vector<1x2x128xf32>
      %91 = vector.shape_cast %90 : vector<1x2x128xf32> to vector<2x128xf32>
      %92 = vector.shape_cast %89 : vector<2x128xf32> to vector<1x2x128xf32>
      tpu.vector_store %arg5[%c1_40, %c0_41, %c0_42], %92 {strides = array<i32>} : memref<3x2x128xf32, #tpu.memory_space<vmem>>, vector<1x2x128xf32>,
      %93 = vector.broadcast %70 : f32 to vector<2x128xf32>
      %94 = arith.mulf %93, %62 : vector<2x128xf32>
      %95 = vector.broadcast %71 : f32 to vector<2x128xf32>
      %96 = arith.mulf %95, %63 : vector<2x128xf32>
      %97 = arith.addf %94, %96 : vector<2x128xf32>
      %98 = vector.broadcast %72 : f32 to vector<2x128xf32>
      %99 = arith.addf %97, %98 : vector<2x128xf32>
      %c2_43 = arith.constant 2 : index
      %c0_44 = arith.constant 0 : index
      %c0_45 = arith.constant 0 : index
      %100 = vector.load %arg5[%c2_43, %c0_44, %c0_45] : memref<3x2x128xf32, #tpu.memory_space<vmem>>, vector<1x2x128xf32>
      %101 = vector.shape_cast %100 : vector<1x2x128xf32> to vector<2x128xf32>
      %102 = vector.shape_cast %99 : vector<2x128xf32> to vector<1x2x128xf32>
      tpu.vector_store %arg5[%c2_43, %c0_44, %c0_45], %102 {strides = array<i32>} : memref<3x2x128xf32, #tpu.memory_space<vmem>>, vector<1x2x128xf32>,
    } else {
    }
    %c0 = arith.constant 0 : index
    %c0_1 = arith.constant 0 : index
    %c0_2 = arith.constant 0 : index
    %3 = vector.load %arg3[%c0, %c0_1, %c0_2] : memref<1x2x128xf32, #tpu.memory_space<vmem>>, vector<1x2x128xf32>
    %4 = vector.shape_cast %3 : vector<1x2x128xf32> to vector<2x128xf32>
    %c0_3 = arith.constant 0 : index
    %c0_4 = arith.constant 0 : index
    %c0_5 = arith.constant 0 : index
    %5 = vector.load %arg5[%c0_3, %c0_4, %c0_5] : memref<3x2x128xf32, #tpu.memory_space<vmem>>, vector<1x2x128xf32>
    %6 = vector.shape_cast %5 : vector<1x2x128xf32> to vector<2x128xf32>
    %7 = arith.mulf %4, %6 : vector<2x128xf32>
    %c0_6 = arith.constant 0 : index
    %c0_7 = arith.constant 0 : index
    %c0_8 = arith.constant 0 : index
    %c0_9 = arith.constant 0 : index
    %8 = vector.load %arg4[%c0_6, %c0_7, %c0_8, %c0_9] : memref<1x4x2x128xf32, #tpu.memory_space<vmem>>, vector<1x1x2x128xf32>
    %9 = vector.shape_cast %8 : vector<1x1x2x128xf32> to vector<2x128xf32>
    %10 = vector.shape_cast %7 : vector<2x128xf32> to vector<1x1x2x128xf32>
    tpu.vector_store %arg4[%c0_6, %c0_7, %c0_8, %c0_9], %10 {strides = array<i32>} : memref<1x4x2x128xf32, #tpu.memory_space<vmem>>, vector<1x1x2x128xf32>,
    %c1 = arith.constant 1 : index
    %c0_10 = arith.constant 0 : index
    %c0_11 = arith.constant 0 : index
    %11 = vector.load %arg5[%c1, %c0_10, %c0_11] : memref<3x2x128xf32, #tpu.memory_space<vmem>>, vector<1x2x128xf32>
    %12 = vector.shape_cast %11 : vector<1x2x128xf32> to vector<2x128xf32>
    %13 = arith.mulf %4, %12 : vector<2x128xf32>
    %c0_12 = arith.constant 0 : index
    %c1_13 = arith.constant 1 : index
    %c0_14 = arith.constant 0 : index
    %c0_15 = arith.constant 0 : index
    %14 = vector.load %arg4[%c0_12, %c1_13, %c0_14, %c0_15] : memref<1x4x2x128xf32, #tpu.memory_space<vmem>>, vector<1x1x2x128xf32>
    %15 = vector.shape_cast %14 : vector<1x1x2x128xf32> to vector<2x128xf32>
    %16 = vector.shape_cast %13 : vector<2x128xf32> to vector<1x1x2x128xf32>
    tpu.vector_store %arg4[%c0_12, %c1_13, %c0_14, %c0_15], %16 {strides = array<i32>} : memref<1x4x2x128xf32, #tpu.memory_space<vmem>>, vector<1x1x2x128xf32>,
    %c2 = arith.constant 2 : index
    %c0_16 = arith.constant 0 : index
    %c0_17 = arith.constant 0 : index
    %17 = vector.load %arg5[%c2, %c0_16, %c0_17] : memref<3x2x128xf32, #tpu.memory_space<vmem>>, vector<1x2x128xf32>
    %18 = vector.shape_cast %17 : vector<1x2x128xf32> to vector<2x128xf32>
    %19 = arith.mulf %4, %18 : vector<2x128xf32>
    %c0_18 = arith.constant 0 : index
    %c2_19 = arith.constant 2 : index
    %c0_20 = arith.constant 0 : index
    %c0_21 = arith.constant 0 : index
    %20 = vector.load %arg4[%c0_18, %c2_19, %c0_20, %c0_21] : memref<1x4x2x128xf32, #tpu.memory_space<vmem>>, vector<1x1x2x128xf32>
    %21 = vector.shape_cast %20 : vector<1x1x2x128xf32> to vector<2x128xf32>
    %22 = vector.shape_cast %19 : vector<2x128xf32> to vector<1x1x2x128xf32>
    tpu.vector_store %arg4[%c0_18, %c2_19, %c0_20, %c0_21], %22 {strides = array<i32>} : memref<1x4x2x128xf32, #tpu.memory_space<vmem>>, vector<1x1x2x128xf32>,
    %cst = arith.constant 1.000000e+00 : f32
    %23 = vector.broadcast %cst : f32 to vector<2x128xf32>
    %c0_22 = arith.constant 0 : index
    %c3 = arith.constant 3 : index
    %c0_23 = arith.constant 0 : index
    %c0_24 = arith.constant 0 : index
    %24 = vector.load %arg4[%c0_22, %c3, %c0_23, %c0_24] : memref<1x4x2x128xf32, #tpu.memory_space<vmem>>, vector<1x1x2x128xf32>
    %25 = vector.shape_cast %24 : vector<1x1x2x128xf32> to vector<2x128xf32>
    %26 = vector.shape_cast %23 : vector<2x128xf32> to vector<1x1x2x128xf32>
    tpu.vector_store %arg4[%c0_22, %c3, %c0_23, %c0_24], %26 {strides = array<i32>} : memref<1x4x2x128xf32, #tpu.memory_space<vmem>>, vector<1x1x2x128xf32>,
    return
  }
  func.func @transform_0(%arg0: i32, %arg1: i32, %arg2: memref<9xf32, #tpu.memory_space<smem>>) -> (i32, i32, i32) {
    %c0_i32 = arith.constant 0 : i32
    %c0_i32_0 = arith.constant 0 : i32
    return %arg1, %arg0, %c0_i32 : i32, i32, i32
  }
  func.func @transform_1(%arg0: i32, %arg1: i32, %arg2: memref<9xf32, #tpu.memory_space<smem>>) -> (i32, i32, i32, i32) {
    %c0_i32 = arith.constant 0 : i32
    %c0_i32_0 = arith.constant 0 : i32
    %c0_i32_1 = arith.constant 0 : i32
    return %arg1, %c0_i32, %arg0, %c0_i32_0 : i32, i32, i32, i32
  }
}

</mosaic_0001>

<llo_original>
// kernel: backproject_depth.1
$region0: #{backproject_depth.1}
  #allocation0 [shape = 'u32[]', space=smem, size = 0x4, offset = 0x4, fixed_abs, tag = 'smem constant byte address 0x4 - core index']
  #allocation1 [shape = 'u32[144,128]{1,0:T(1,128)}', space=vmem, size = 0x12000, scoped, tag = 'internal scratch']
  #allocation2 [shape = 'f32[3,2,128]{2,1,0:T(2,128)}', space=vmem, size = 0xc00, scoped, tag = 'scratch operand']
  #allocation3 [shape = 's32[1]{0}', space=sflag, size = 0x4, scoped, tag = 'scoped memory for backproject_depth.1']
  #allocation4 [shape = 'u8[512]{0}', space=smem, size = 0x200, scoped, tag = 'prefetched SMEM operand 0']
  %s0 = inlined_call_operand.vmem [shape: f32[9], index: 0, kind: input, shape index: {}]
  %s1 = inlined_call_operand.vmem [shape: f32[2,2,128], index: 1, kind: input, shape index: {}]
  %s2 = inlined_call_operand.vmem [shape: f32[2,4,2,128], index: 2, kind: output, shape index: {}]
  %s3 = sld [smem:[#allocation0]]
  $region41: #{backproject_depth.1} parent=0
    _
  %s5 = ssub.s32 1, %s3
  %s6 = scalar_select 0, %s5, %s3
  %s7 = sshll.u32 %s0, 4
  %s8 = int_to_ptr.vmem [resolvable:$true] %s7
  %10 = dma.vmem_to_smem %s8, 16, [#allocation4], [#allocation3]
  %11 = dma.done [#allocation3], 16
  %12 = sfence
  loop: start=0, step=1, limit=4
  $region2: #{backproject_depth.1} parent=0 // loop_pre_header
    _
  $region3: #{backproject_depth.1} parent=0 // loop_header
    %s14 = sphi 0, %s18
    %p15 = scmp.ge.s32.totalorder %s14, 4
    %s21 = sphi 0, %s33
    %s22 = sphi 0, %s29
    %s23 = sphi 0, %s21
    %s24 = sphi 0, %s22
    %s25 = sphi 0, %s23
    %s26 = sphi 0, %s24
    %s38 = sphi 0, %s40
    %s41 = sphi 0, %s38
    %s42 = sphi 0, %s41
    %s58 = sphi 0, %s42
    %s66 = sphi 0, %s68
    %s69 = sphi 0, %s66
    %s70 = sphi 0, %s69
    %s86 = sphi 0, %s70
  $region4: #{backproject_depth.1} parent=0 // loop_header_branch
    %17 = sbr.rel (%p15) target = $region8
  $region5: #{backproject_depth.1} parent=0 // loop_body
    %s19 = ssub.s32 %s14, 1
    %s20 = ssub.s32 %s14, 2
    %s27 = sadd.s32 1, %s22
    %p28 = scmp.ge.s32.totalorder %s27, 2
    %s29 = scalar_select %p28, 0, %s27
    %s30 = sadd.s32 1, %s21
    %s31 = scalar_select %p28, %s30, %s21
    %p32 = scmp.ge.s32.totalorder %s31, 1
    %s33 = scalar_select %p32, 0, %s31
    %s34 = ssub.s32 %s22, %s29
    %s35 = ssub.s32 %s21, %s33
    %s36 = sor.u32 %s34, %s35
    %p37 = scmp.eq.s32.totalorder %s36, 0
    %s39 = sadd.s32 %s38, 1
    %s40 = scalar_select %p37, %s38, %s39
    %p43 = pneg %p37
    %p44 = scmp.eq.s32.totalorder %s14, 1
    %p45 = por %p43, %p44
    %p46 = scmp.ne.s32.totalorder %s38, %s41
    %p47 = scmp.eq.s32.totalorder %s14, 0
    %p48 = por %p46, %p47
    %p49 = scmp.ne.s32.totalorder %s38, %s41
    %p50 = scmp.eq.s32.totalorder %s19, 1
    %p51 = por %p49, %p50
    %p52 = scmp.ne.s32.totalorder %s41, %s42
    %p53 = scmp.eq.s32.totalorder %s19, 0
    %p54 = por %p52, %p53
    %p55 = scmp.ne.s32.totalorder %s41, %s42
    %p56 = scmp.eq.s32.totalorder %s20, 1
    %p57 = por %p55, %p56
    %p59 = scmp.ne.s32.totalorder %s42, %s58
    %p60 = scmp.eq.s32.totalorder %s20, 0
    %p61 = por %p59, %p60
    %s62 = ssub.s32 %s22, %s29
    %s63 = ssub.s32 %s21, %s33
    %s64 = sor.u32 %s62, %s63
    %p65 = scmp.eq.s32.totalorder %s64, 0
    %s67 = sadd.s32 %s66, 1
    %s68 = scalar_select %p65, %s66, %s67
    %p71 = pneg %p65
    %p72 = scmp.eq.s32.totalorder %s14, 1
    %p73 = por %p71, %p72
    %p74 = scmp.ne.s32.totalorder %s66, %s69
    %p75 = scmp.eq.s32.totalorder %s14, 0
    %p76 = por %p74, %p75
    %p77 = scmp.ne.s32.totalorder %s66, %s69
    %p78 = scmp.eq.s32.totalorder %s19, 1
    %p79 = por %p77, %p78
    %p80 = scmp.ne.s32.totalorder %s69, %s70
    %p81 = scmp.eq.s32.totalorder %s19, 0
    %p82 = por %p80, %p81
    %p83 = scmp.ne.s32.totalorder %s69, %s70
    %p84 = scmp.eq.s32.totalorder %s20, 1
    %p85 = por %p83, %p84
    %p87 = scmp.ne.s32.totalorder %s70, %s86
    %p88 = scmp.eq.s32.totalorder %s20, 0
    %p89 = por %p87, %p88
    %p90 = scmp.le.s32.totalorder 1, %s14
    %p91 = scmp.lt.s32.totalorder %s14, 3
    %p92 = pnand %p90, %p91
    %p93 = pneg %p92
    // Predicated region
    $region9: #{backproject_depth.1} parent=5 // pred_check
      _
    $region10: #{backproject_depth.1} parent=5 // pred_check_branch
      %95 = sbr.rel (%p92) target = $region12
    $region11: #{backproject_depth.1} parent=5 // pred_region
      %s96 = ssub.s32 %s14, 1
    $region12: #{backproject_depth.1} parent=5 // pred_fallthru
      _
    %p97 = scmp.lt.s32.totalorder %s14, 2
    // Predicated region
    $region13: #{backproject_depth.1} parent=5 // pred_check
      %p98 = pneg %p97
    $region14: #{backproject_depth.1} parent=5 // pred_check_branch
      %100 = sbr.rel (%p98) target = $region16
    $region15: #{backproject_depth.1} parent=5 // pred_region
      // Predicated region
      $region17: #{backproject_depth.1} parent=15 // pred_check
        %p101 = pneg %p48
      $region18: #{backproject_depth.1} parent=15 // pred_check_branch
        %103 = sbr.rel (%p101) target = $region20
      $region19: #{backproject_depth.1} parent=15 // pred_region
        %p104 = scmp.lt.s32.totalorder %s22, 1
        %s105 = scalar_select %p104, %s22, 1
        %p106 = scmp.lt.s32.totalorder %s21, 0
        %s107 = scalar_select %p106, %s21, 0
        %s108 = sadd.s32 %s107, %s105
        %s109 = smul.addr %s108, 2
        %s110 = scalar_lea.vmem %s1, %s109
      $region20: #{backproject_depth.1} parent=15 // pred_fallthru
        _
    $region16: #{backproject_depth.1} parent=5 // pred_fallthru
      _
    %p111 = scmp.le.s32.totalorder 1, %s14
    %p112 = scmp.lt.s32.totalorder %s14, 3
    %p113 = pnand %p111, %p112
    %p114 = pneg %p113
    // Predicated region
    $region21: #{backproject_depth.1} parent=5 // pred_check
      _
    $region22: #{backproject_depth.1} parent=5 // pred_check_branch
      %116 = sbr.rel (%p113) target = $region24
    $region23: #{backproject_depth.1} parent=5 // pred_region
      %s117 = ssub.s32 %s14, 1
      %p118 = scmp.lt.s32.totalorder %s24, 1
      %s119 = scalar_select %p118, %s24, 1
      %p120 = scmp.lt.s32.totalorder %s23, 0
      %s121 = scalar_select %p120, %s23, 0
      %s122 = sadd.s32 %s121, %s119
      %s123 = smul.addr %s122, 2
      %s124 = scalar_lea.vmem %s1, %s123
      %p125 = pneg %p54
      %p126 = pneg %p51
      %p127 = pneg %p82
      %p128 = pneg %p79
      %p129 = scmp.lt.s32.totalorder %s24, 1
      %s130 = scalar_select %p129, %s24, 1
      %p131 = scmp.lt.s32.totalorder %s23, 0
      %s132 = scalar_select %p131, %s23, 0
      %s133 = smul.addr %s130, 4
      %s134 = sadd.s32 %s132, %s133
      %s135 = smul.addr %s134, 2
      %s136 = scalar_lea.vmem %s2, %s135
      %p137 = scmp.lt.s32.totalorder %s24, 1
      %s138 = scalar_select %p137, %s24, 1
      %p139 = scmp.lt.s32.totalorder %s23, 0
      %s140 = scalar_select %p139, %s23, 0
      %s141 = sadd.s32 %s140, %s138
      %s142 = smul.addr %s141, 2
      %s143 = scalar_lea.vmem %s1, %s142
      %p144 = scmp.lt.s32.totalorder %s24, 1
      %s145 = scalar_select %p144, %s24, 1
      %p146 = scmp.lt.s32.totalorder %s23, 0
      %s147 = scalar_select %p146, %s23, 0
      %s148 = smul.addr %s145, 4
      %s149 = sadd.s32 %s147, %s148
      %s150 = smul.addr %s149, 2
      %s151 = scalar_lea.vmem %s2, %s150
      %p152 = scmp.eq.s32.totalorder %s24, 0
      // Predicated region
      $region25: #{backproject_depth.1} parent=23 // pred_check
        %p153 = pneg %p152
      $region26: #{backproject_depth.1} parent=23 // pred_check_branch
        %155 = sbr.rel (%p153) target = $region28
      $region27: #{backproject_depth.1} parent=23 // pred_region
        %v156 = vlaneseq
        %v157 = vshrl.u32 %v156, 7
        %v158 = vlaneseq
        %v159 = vand.u32 %v158, 127
        %s160 = smul.u32 %s23, 256
        %v161 = vmul.u32 %v157, 128
        %v162 = vstv %s160
        %v163 = vadd.s32 %v162, %v161
        %v164 = vadd.s32 %v163, %v159
        %v165 = vcvt.s32.f32 %v164
        %v166 = vmul.f32 %v165, 0.0625
        %v167 = vcvt.f32.s32.to.zero.pseudo %v166
        %v168 = vmul.u32 %v167, 16
        %v169 = vsub.s32 %v164, %v168
        %vm170 = vcmp.lt.s32.totalorder %v169, 0
        %v171 = vsub.s32 %v167, 1
        %v172 = vsel %vm170, %v171, %v167
        %v173 = vadd.s32 %v169, 16
        %v174 = vsel %vm170, %v173, %v169
        %vm175 = vcmp.ge.s32.totalorder %v174, 16
        %v176 = vadd.s32 %v172, 1
        %v177 = vsel %vm175, %v176, %v172
        %v178 = vsub.s32 %v174, 16
        %v179 = vsel %vm175, %v178, %v174
        %v180 = vcvt.s32.f32 %v179
        %v181 = vcvt.s32.f32 %v177
        %s182 = sld [smem:[#allocation4]]
        %s183 = sld [smem:[#allocation4 + $0x1]]
        %s184 = sld [smem:[#allocation4 + $0x2]]
        %s185 = sld [smem:[#allocation4 + $0x3]]
        %s186 = sld [smem:[#allocation4 + $0x4]]
        %s187 = sld [smem:[#allocation4 + $0x5]]
        %s188 = sld [smem:[#allocation4 + $0x6]]
        %s189 = sld [smem:[#allocation4 + $0x7]]
        %s190 = sld [smem:[#allocation4 + $0x8]]
        %v191 = vstv %s182
        %v192 = vmul.f32 %v191, %v180
        %v193 = vstv %s183
        %v194 = vmul.f32 %v193, %v181
        %v195 = vadd.f32 %v192, %v194
        %v196 = vstv %s184
        %v197 = vadd.f32 %v195, %v196
        %198 = vst [vmem:[#allocation2] sm:$0x3] %v197
        %v199 = vstv %s185
        %v200 = vmul.f32 %v199, %v180
        %v201 = vstv %s186
        %v202 = vmul.f32 %v201, %v181
        %v203 = vadd.f32 %v200, %v202
        %v204 = vstv %s187
        %v205 = vadd.f32 %v203, %v204
        %s206 = scalar_lea.vmem [#allocation2], 2
        %207 = vst [vmem:[%s206] sm:$0x3] %v205
        %v208 = vstv %s188
        %v209 = vmul.f32 %v208, %v180
        %v210 = vstv %s189
        %v211 = vmul.f32 %v210, %v181
        %v212 = vadd.f32 %v209, %v211
        %v213 = vstv %s190
        %v214 = vadd.f32 %v212, %v213
        %s215 = scalar_lea.vmem [#allocation2], 4
        %216 = vst [vmem:[%s215] sm:$0x3] %v214
      $region28: #{backproject_depth.1} parent=23 // pred_fallthru
        _
      %v217 = vld [vmem:[%s143] sm:$0x3]
      %v218 = vld [vmem:[#allocation2] sm:$0x3]
      %v219 = vmul.f32 %v217, %v218
      %220 = vst [vmem:[%s151] sm:$0x3] %v219
      %s221 = scalar_lea.vmem [#allocation2], 2
      %v222 = vld [vmem:[%s221] sm:$0x3]
      %v223 = vmul.f32 %v217, %v222
      %s224 = scalar_lea.vmem %s151, 2
      %225 = vst [vmem:[%s224] sm:$0x3] %v223
      %s226 = scalar_lea.vmem [#allocation2], 4
      %v227 = vld [vmem:[%s226] sm:$0x3]
      %v228 = vmul.f32 %v217, %v227
      %s229 = scalar_lea.vmem %s151, 4
      %230 = vst [vmem:[%s229] sm:$0x3] %v228
      %s231 = scalar_lea.vmem %s151, 6
      %232 = vst [vmem:[%s231] sm:$0x3] 1.0
      %p233 = scmp.lt.s32.totalorder %s24, 1
      %s234 = scalar_select %p233, %s24, 1
      %p235 = scmp.lt.s32.totalorder %s23, 0
      %s236 = scalar_select %p235, %s23, 0
      %s237 = smul.addr %s234, 4
      %s238 = sadd.s32 %s236, %s237
      %s239 = smul.addr %s238, 2
      %s240 = scalar_lea.vmem %s2, %s239
      // Predicated region
      $region29: #{backproject_depth.1} parent=23 // pred_check
        %p241 = pneg %p79
      $region30: #{backproject_depth.1} parent=23 // pred_check_branch
        %243 = sbr.rel (%p241) target = $region32
      $region31: #{backproject_depth.1} parent=23 // pred_region
        _
      $region32: #{backproject_depth.1} parent=23 // pred_fallthru
        _
    $region24: #{backproject_depth.1} parent=5 // pred_fallthru
      _
    %p244 = scmp.le.s32.totalorder 2, %s14
    // Predicated region
    $region33: #{backproject_depth.1} parent=5 // pred_check
      %p245 = pneg %p244
    $region34: #{backproject_depth.1} parent=5 // pred_check_branch
      %247 = sbr.rel (%p245) target = $region36
    $region35: #{backproject_depth.1} parent=5 // pred_region
      %s248 = ssub.s32 %s14, 2
      // Predicated region
      $region37: #{backproject_depth.1} parent=35 // pred_check
        %p249 = pneg %p85
      $region38: #{backproject_depth.1} parent=35 // pred_check_branch
        %251 = sbr.rel (%p249) target = $region40
      $region39: #{backproject_depth.1} parent=35 // pred_region
        %p252 = scmp.lt.s32.totalorder %s26, 1
        %s253 = scalar_select %p252, %s26, 1
        %p254 = scmp.lt.s32.totalorder %s25, 0
        %s255 = scalar_select %p254, %s25, 0
        %s256 = smul.addr %s253, 4
        %s257 = sadd.s32 %s255, %s256
        %s258 = smul.addr %s257, 2
        %s259 = scalar_lea.vmem %s2, %s258
      $region40: #{backproject_depth.1} parent=35 // pred_fallthru
        _
    $region36: #{backproject_depth.1} parent=5 // pred_fallthru
      _
  $region6: #{backproject_depth.1} parent=0 // loop_footer
    %s18 = sadd.s32 1, %s14
  $region7: #{backproject_depth.1} parent=0 // loop_footer_branch
    %13 = sbr.rel target = $region3
  $region8: #{backproject_depth.1} parent=0 // loop_exit
    _

</llo_original>
